<compile_context>
chip_gen: v7x
topology: tpu7x:2x2x1
jax: 0.10.0
libtpu: 0.0.40
codegen_flags: <defaults>
</compile_context>

<pallas_src>
import jax
import jax.numpy as jnp
from jax.experimental import pallas as pl
from jax.experimental.pallas import tpu as pltpu

LANE = 128
ROW_TILE_CAP = 1024     # amortize per-step overhead; footprint still << VMEM
OUT_LANE_PAD = 8        # narrow output slab (masked vst is fine, bytes matter)


def _round_up(n, m):
    return (n + m - 1) // m * m


def mlp_kernel(x_ref,
               w1_ref, b1_ref,
               w2_ref, b2_ref,
               w3_ref, b3_ref,
               w4_ref, b4_ref,
               o_ref):
    def layer(h, w_ref, b_ref):
        # bf16 operands -> MXU-native on v6e/v7x; f32 accumulation.
        y = jnp.dot(h.astype(jnp.bfloat16), w_ref[...],
                    preferred_element_type=jnp.float32)
        # bias-add + ReLU in f32 on the VPU (v5e has no bf16 VPU).
        return jnp.maximum(y + b_ref[...], 0.0)

    h = x_ref[...]                      # (TB, 128) bf16 (cast in layer is no-op)
    h = layer(h, w1_ref, b1_ref)        # (TB, 512)
    h = layer(h, w2_ref, b2_ref)        # (TB, 256)
    h = layer(h, w3_ref, b3_ref)        # (TB, 128)
    h = layer(h, w4_ref, b4_ref)        # (TB, 8) -- narrow output
    o_ref[...] = h.astype(o_ref.dtype)


def _choose_row_tile(B):
    """Row tile: multiple of 16 (bf16 sublane packing), capped at ROW_TILE_CAP,
    and >=2 grid steps when the batch allows (v7x megacore sharding)."""
    b16 = _round_up(B, 16)
    nsteps = max(pl.cdiv(b16, ROW_TILE_CAP), 2 if b16 >= 32 else 1)
    tb = _round_up(pl.cdiv(b16, nsteps), 16)
    b_pad = _round_up(b16, tb)
    return tb, b_pad


def mlp_forward(x, params, out_features=1):
    """x: (B, d_in) f32.
    params: list of (W bf16, padded to (in_pad, out_pad); b f32, (1, out_pad))."""
    B, d_in = x.shape
    d_in_pad = params[0][0].shape[0]
    d_out_pad = params[-1][0].shape[1]

    tb, b_pad = _choose_row_tile(B)

    # Zero-pad x and stream it as bf16 (cast fused into the padding write).
    # Padded x columns / weight rows+cols / bias lanes are all zero, so padded
    # lanes stay exactly 0 through every ReLU and the sliced output is unchanged.
    x_pad = (jnp.zeros((b_pad, d_in_pad), jnp.bfloat16)
             .at[:B, :d_in].set(x.astype(jnp.bfloat16)))

    flat_args = [x_pad]
    in_specs = [pl.BlockSpec((tb, d_in_pad), lambda i: (i, 0))]
    for w, b in params:
        flat_args += [w, b]
        # Constant index_map -> weights/biases DMA'd once, resident across grid steps.
        in_specs += [pl.BlockSpec(w.shape, lambda i: (0, 0)),
                     pl.BlockSpec(b.shape, lambda i: (0, 0))]

    flops = 2 * b_pad * sum(w.shape[0] * w.shape[1] for w, _ in params)
    bytes_accessed = (x_pad.size * 2 + b_pad * d_out_pad * 4
                      + sum(w.size * w.dtype.itemsize + b.size * 4
                            for w, b in params))

    out_pad = pl.pallas_call(
        mlp_kernel,
        out_shape=jax.ShapeDtypeStruct((b_pad, d_out_pad), jnp.float32),
        grid=(b_pad // tb,),
        in_specs=in_specs,
        out_specs=pl.BlockSpec((tb, d_out_pad), lambda i: (i, 0)),
        compiler_params=pltpu.CompilerParams(
            dimension_semantics=("parallel",)),
        cost_estimate=pl.CostEstimate(
            flops=flops, transcendentals=0, bytes_accessed=bytes_accessed),
    )(*flat_args)

    return out_pad[:B, :out_features]


def init_params(key, input_size=120, output_size=1):
    """nn.Linear-style init U(-1/sqrt(fan_in), 1/sqrt(fan_in)).

    Returns (params_padded, params_ref):
      params_padded: (W bf16, fan_in padded to 128; fan_out padded to 128 for
                      hidden layers, to 8 for the last layer; b f32 padded)
      params_ref:    unpadded f32 (for the pure-JAX reference).
    """
    dims = [
        (input_size, input_size * 4),
        (input_size * 4, input_size * 2),
        (input_size * 2, input_size * 1),
        (input_size, output_size),
    ]
    params_pad, params_ref = [], []
    n_layers = len(dims)
    for i, (fan_in, fan_out) in enumerate(dims):
        kw, kb = jax.random.split(jax.random.fold_in(key, i))
        bound = 1.0 / jnp.sqrt(jnp.float32(fan_in))
        w = jax.random.uniform(kw, (fan_in, fan_out), jnp.float32, -bound, bound)
        b = jax.random.uniform(kb, (1, fan_out), jnp.float32, -bound, bound)
        params_ref.append((w, b))

        fi_pad = _round_up(fan_in, LANE)
        # Hidden layers stay lane-dense (128); last layer only needs a narrow
        # slab -> 64x less output HBM traffic.
        fo_pad = _round_up(fan_out, LANE if i < n_layers - 1 else OUT_LANE_PAD)
        w_pad = jnp.zeros((fi_pad, fo_pad), jnp.float32).at[:fan_in, :fan_out].set(w)
        b_pad = jnp.zeros((1, fo_pad), jnp.float32).at[:, :fan_out].set(b)
        params_pad.append((w_pad.astype(jnp.bfloat16), b_pad))
    return params_pad, params_ref


def mlp_reference(x, params_ref):
    h = x
    for w, b in params_ref:
        h = jnp.maximum(h @ w + b, 0.0)
    return h


if __name__ == "__main__":
    key = jax.random.PRNGKey(0)
    input_size, output_size = 120, 1
    batch = 8

    params_pad, params_ref = init_params(key, input_size, output_size)
    x = jax.random.normal(jax.random.fold_in(key, 1000), (batch, input_size),
                          dtype=jnp.float32)

    out = mlp_forward(x, params_pad, out_features=output_size)
    out = jax.block_until_ready(out)

    ref = mlp_reference(x, params_ref)
    assert out.shape == (batch, output_size), out.shape
    # bf16 matmul operands / bf16-stored weights vs f32 reference -> loose tol.
    assert jnp.allclose(out, ref, atol=5e-2, rtol=5e-2), "mismatch vs reference"

    print("KERNEL_OK")
</pallas_src>

<mosaic_0001>
module attributes {stable_mosaic.version = 11 : i64} {
  func.func @mlp_kernel(%arg0: i32, %arg1: memref<16x128xbf16, #tpu.memory_space<vmem>>, %arg2: memref<128x512xbf16, #tpu.memory_space<vmem>>, %arg3: memref<1x512xf32, #tpu.memory_space<vmem>>, %arg4: memref<512x256xbf16, #tpu.memory_space<vmem>>, %arg5: memref<1x256xf32, #tpu.memory_space<vmem>>, %arg6: memref<256x128xbf16, #tpu.memory_space<vmem>>, %arg7: memref<1x128xf32, #tpu.memory_space<vmem>>, %arg8: memref<128x8xbf16, #tpu.memory_space<vmem>>, %arg9: memref<1x8xf32, #tpu.memory_space<vmem>>, %arg10: memref<16x8xf32, #tpu.memory_space<vmem>>) attributes {dimension_semantics = [#tpu.dimension_semantics<parallel>], iteration_bounds = array<i64: 1>, scalar_prefetch = 0 : i64, scratch_operands = 0 : i64, tpu.core_type = #tpu.core_type<tc>, window_params = [{transform_indices = @transform_0, window_bounds = array<i64: 16, 128>}, {pipeline_mode = #tpu.pipeline_mode<synchronous>, transform_indices = @transform_1, window_bounds = array<i64: 128, 512>}, {pipeline_mode = #tpu.pipeline_mode<synchronous>, transform_indices = @transform_2, window_bounds = array<i64: 1, 512>}, {pipeline_mode = #tpu.pipeline_mode<synchronous>, transform_indices = @transform_3, window_bounds = array<i64: 512, 256>}, {pipeline_mode = #tpu.pipeline_mode<synchronous>, transform_indices = @transform_4, window_bounds = array<i64: 1, 256>}, {pipeline_mode = #tpu.pipeline_mode<synchronous>, transform_indices = @transform_5, window_bounds = array<i64: 256, 128>}, {pipeline_mode = #tpu.pipeline_mode<synchronous>, transform_indices = @transform_6, window_bounds = array<i64: 1, 128>}, {pipeline_mode = #tpu.pipeline_mode<synchronous>, transform_indices = @transform_7, window_bounds = array<i64: 128, 8>}, {pipeline_mode = #tpu.pipeline_mode<synchronous>, transform_indices = @transform_8, window_bounds = array<i64: 1, 8>}, {transform_indices = @transform_9, window_bounds = array<i64: 16, 8>}]} {
    %c0 = arith.constant 0 : index
    %c0_0 = arith.constant 0 : index
    %0 = vector.load %arg1[%c0, %c0_0] : memref<16x128xbf16, #tpu.memory_space<vmem>>, vector<16x128xbf16>
    %c0_1 = arith.constant 0 : index
    %c0_2 = arith.constant 0 : index
    %1 = vector.load %arg2[%c0_1, %c0_2] : memref<128x512xbf16, #tpu.memory_space<vmem>>, vector<128x512xbf16>
    %cst = arith.constant dense<0.000000e+00> : vector<16x512xf32>
    %2 = tpu.matmul %0, %1, %cst {dimension_numbers = #tpu.dot_dimension_numbers<[1], [0], [0], [1], [0, 0, 1, 1], [], []>} : vector<16x128xbf16>, vector<128x512xbf16>, vector<16x512xf32> -> vector<16x512xf32>
    %c0_3 = arith.constant 0 : index
    %c0_4 = arith.constant 0 : index
    %3 = vector.load %arg3[%c0_3, %c0_4] : memref<1x512xf32, #tpu.memory_space<vmem>>, vector<1x512xf32>
    %4 = vector.broadcast %3 : vector<1x512xf32> to vector<16x512xf32>
    %5 = arith.addf %2, %4 : vector<16x512xf32>
    %cst_5 = arith.constant 0.000000e+00 : f32
    %6 = vector.broadcast %cst_5 : f32 to vector<16x512xf32>
    %7 = arith.maximumf %5, %6 : vector<16x512xf32>
    %8 = arith.truncf %7 : vector<16x512xf32> to vector<16x512xbf16>
    %c0_6 = arith.constant 0 : index
    %c0_7 = arith.constant 0 : index
    %9 = vector.load %arg4[%c0_6, %c0_7] : memref<512x256xbf16, #tpu.memory_space<vmem>>, vector<512x256xbf16>
    %cst_8 = arith.constant dense<0.000000e+00> : vector<16x256xf32>
    %10 = tpu.matmul %8, %9, %cst_8 {dimension_numbers = #tpu.dot_dimension_numbers<[1], [0], [0], [1], [0, 0, 1, 1], [], []>} : vector<16x512xbf16>, vector<512x256xbf16>, vector<16x256xf32> -> vector<16x256xf32>
    %c0_9 = arith.constant 0 : index
    %c0_10 = arith.constant 0 : index
    %11 = vector.load %arg5[%c0_9, %c0_10] : memref<1x256xf32, #tpu.memory_space<vmem>>, vector<1x256xf32>
    %12 = vector.broadcast %11 : vector<1x256xf32> to vector<16x256xf32>
    %13 = arith.addf %10, %12 : vector<16x256xf32>
    %cst_11 = arith.constant 0.000000e+00 : f32
    %14 = vector.broadcast %cst_11 : f32 to vector<16x256xf32>
    %15 = arith.maximumf %13, %14 : vector<16x256xf32>
    %16 = arith.truncf %15 : vector<16x256xf32> to vector<16x256xbf16>
    %c0_12 = arith.constant 0 : index
    %c0_13 = arith.constant 0 : index
    %17 = vector.load %arg6[%c0_12, %c0_13] : memref<256x128xbf16, #tpu.memory_space<vmem>>, vector<256x128xbf16>
    %cst_14 = arith.constant dense<0.000000e+00> : vector<16x128xf32>
    %18 = tpu.matmul %16, %17, %cst_14 {dimension_numbers = #tpu.dot_dimension_numbers<[1], [0], [0], [1], [0, 0, 1, 1], [], []>} : vector<16x256xbf16>, vector<256x128xbf16>, vector<16x128xf32> -> vector<16x128xf32>
    %c0_15 = arith.constant 0 : index
    %c0_16 = arith.constant 0 : index
    %19 = vector.load %arg7[%c0_15, %c0_16] : memref<1x128xf32, #tpu.memory_space<vmem>>, vector<1x128xf32>
    %20 = vector.broadcast %19 : vector<1x128xf32> to vector<16x128xf32>
    %21 = arith.addf %18, %20 : vector<16x128xf32>
    %cst_17 = arith.constant 0.000000e+00 : f32
    %22 = vector.broadcast %cst_17 : f32 to vector<16x128xf32>
    %23 = arith.maximumf %21, %22 : vector<16x128xf32>
    %24 = arith.truncf %23 : vector<16x128xf32> to vector<16x128xbf16>
    %c0_18 = arith.constant 0 : index
    %c0_19 = arith.constant 0 : index
    %25 = vector.load %arg8[%c0_18, %c0_19] : memref<128x8xbf16, #tpu.memory_space<vmem>>, vector<128x8xbf16>
    %cst_20 = arith.constant dense<0.000000e+00> : vector<16x8xf32>
    %26 = tpu.matmul %24, %25, %cst_20 {dimension_numbers = #tpu.dot_dimension_numbers<[1], [0], [0], [1], [0, 0, 1, 1], [], []>} : vector<16x128xbf16>, vector<128x8xbf16>, vector<16x8xf32> -> vector<16x8xf32>
    %c0_21 = arith.constant 0 : index
    %c0_22 = arith.constant 0 : index
    %27 = vector.load %arg9[%c0_21, %c0_22] : memref<1x8xf32, #tpu.memory_space<vmem>>, vector<1x8xf32>
    %28 = vector.broadcast %27 : vector<1x8xf32> to vector<16x8xf32>
    %29 = arith.addf %26, %28 : vector<16x8xf32>
    %cst_23 = arith.constant 0.000000e+00 : f32
    %30 = vector.broadcast %cst_23 : f32 to vector<16x8xf32>
    %31 = arith.maximumf %29, %30 : vector<16x8xf32>
    %c0_24 = arith.constant 0 : index
    %c0_25 = arith.constant 0 : index
    %32 = vector.load %arg10[%c0_24, %c0_25] : memref<16x8xf32, #tpu.memory_space<vmem>>, vector<16x8xf32>
    tpu.vector_store %arg10[%c0_24, %c0_25], %31 {strides = array<i32>} : memref<16x8xf32, #tpu.memory_space<vmem>>, vector<16x8xf32>,
    return
  }
  func.func @transform_0(%arg0: i32) -> (i32, i32) {
    %c0_i32 = arith.constant 0 : i32
    %c0_i32_0 = arith.constant 0 : i32
    return %arg0, %c0_i32 : i32, i32
  }
  func.func @transform_1(%arg0: i32) -> (i32, i32) {
    %c0_i32 = arith.constant 0 : i32
    %c0_i32_0 = arith.constant 0 : i32
    %c0_i32_1 = arith.constant 0 : i32
    return %c0_i32, %c0_i32_0 : i32, i32
  }
  func.func @transform_2(%arg0: i32) -> (i32, i32) {
    %c0_i32 = arith.constant 0 : i32
    %c0_i32_0 = arith.constant 0 : i32
    %c0_i32_1 = arith.constant 0 : i32
    return %c0_i32, %c0_i32_0 : i32, i32
  }
  func.func @transform_3(%arg0: i32) -> (i32, i32) {
    %c0_i32 = arith.constant 0 : i32
    %c0_i32_0 = arith.constant 0 : i32
    %c0_i32_1 = arith.constant 0 : i32
    return %c0_i32, %c0_i32_0 : i32, i32
  }
  func.func @transform_4(%arg0: i32) -> (i32, i32) {
    %c0_i32 = arith.constant 0 : i32
    %c0_i32_0 = arith.constant 0 : i32
    %c0_i32_1 = arith.constant 0 : i32
    return %c0_i32, %c0_i32_0 : i32, i32
  }
  func.func @transform_5(%arg0: i32) -> (i32, i32) {
    %c0_i32 = arith.constant 0 : i32
    %c0_i32_0 = arith.constant 0 : i32
    %c0_i32_1 = arith.constant 0 : i32
    return %c0_i32, %c0_i32_0 : i32, i32
  }
  func.func @transform_6(%arg0: i32) -> (i32, i32) {
    %c0_i32 = arith.constant 0 : i32
    %c0_i32_0 = arith.constant 0 : i32
    %c0_i32_1 = arith.constant 0 : i32
    return %c0_i32, %c0_i32_0 : i32, i32
  }
  func.func @transform_7(%arg0: i32) -> (i32, i32) {
    %c0_i32 = arith.constant 0 : i32
    %c0_i32_0 = arith.constant 0 : i32
    %c0_i32_1 = arith.constant 0 : i32
    return %c0_i32, %c0_i32_0 : i32, i32
  }
  func.func @transform_8(%arg0: i32) -> (i32, i32) {
    %c0_i32 = arith.constant 0 : i32
    %c0_i32_0 = arith.constant 0 : i32
    %c0_i32_1 = arith.constant 0 : i32
    return %c0_i32, %c0_i32_0 : i32, i32
  }
  func.func @transform_9(%arg0: i32) -> (i32, i32) {
    %c0_i32 = arith.constant 0 : i32
    %c0_i32_0 = arith.constant 0 : i32
    return %arg0, %c0_i32 : i32, i32
  }
}

</mosaic_0001>

<llo_original>
// kernel: tpu_custom_call.1
$region0: #{tpu_custom_call.1}
  #allocation0 [shape = 'u32[]', space=smem, size = 0x4, offset = 0x4, fixed_abs, tag = 'smem constant byte address 0x4 - core index']
  #allocation1 [shape = 'u32[144,128]{1,0:T(1,128)}', space=vmem, size = 0x12000, scoped, tag = 'internal scratch']
  %s0 = inlined_call_operand.vmem [shape: bf16[16,128], index: 0, kind: input, shape index: {}]
  %s1 = inlined_call_operand.hbm [shape: bf16[128,512], index: 1, kind: input, shape index: {}]
  %s2 = inlined_call_operand.vmem [shape: f32[1,512], index: 2, kind: input, shape index: {}]
  %s3 = inlined_call_operand.hbm [shape: bf16[512,256], index: 3, kind: input, shape index: {}]
  %s4 = inlined_call_operand.vmem [shape: f32[1,256], index: 4, kind: input, shape index: {}]
  %s5 = inlined_call_operand.hbm [shape: bf16[256,128], index: 5, kind: input, shape index: {}]
  %s6 = inlined_call_operand.vmem [shape: f32[1,128], index: 6, kind: input, shape index: {}]
  %s7 = inlined_call_operand.vmem [shape: bf16[128,8], index: 7, kind: input, shape index: {}]
  %s8 = inlined_call_operand.vmem [shape: f32[1,8], index: 8, kind: input, shape index: {}]
  %s9 = inlined_call_operand.vmem [shape: f32[16,8], index: 9, kind: output, shape index: {}]
  %s10 = sld [smem:[#allocation0]]
  $region58: #{tpu_custom_call.1} parent=0
    _
  %s12 = ssub.s32 1, %s10
  %s13 = scalar_select 0, %s12, %s10
  $region1: #{tpu_custom_call.1} parent=0
    #allocation2 [shape = 'u8[131072]{0}', space=vmem, size = 0x20000, scoped, tag = 'input window, operand 1, single buffered']
    #allocation3 [shape = 's32[1]{0}', space=sflag, size = 0x4, scoped, tag = 'scoped memory for tpu_custom_call.1']
    #allocation4 [shape = 'u8[262144]{0}', space=vmem, size = 0x40000, scoped, tag = 'input window, operand 3, single buffered']
    #allocation5 [shape = 's32[1]{0}', space=sflag, size = 0x4, scoped, tag = 'scoped memory for tpu_custom_call.1']
    #allocation6 [shape = 'u8[65536]{0}', space=vmem, size = 0x10000, scoped, tag = 'input window, operand 5, single buffered']
    %14 = vsyncpa [#allocation3], 0
    %15 = vsyncpa [#allocation5], 0
    // Predicated region
    $region2: #{tpu_custom_call.1} parent=1 // pred_check
      _
    $region3: #{tpu_custom_call.1} parent=1 // pred_check_branch
      %17 = sbr.rel (0) target = $region5
    $region4: #{tpu_custom_call.1} parent=1 // pred_region
      _
    $region5: #{tpu_custom_call.1} parent=1 // pred_fallthru
      _
    // Predicated region
    $region6: #{tpu_custom_call.1} parent=1 // pred_check
      _
    $region7: #{tpu_custom_call.1} parent=1 // pred_check_branch
      %19 = sbr.rel (0) target = $region9
    $region8: #{tpu_custom_call.1} parent=1 // pred_region
      %s21 = ssub.s32 4096, 4096
      %22 = vsyncadd [#allocation3], %s21
      %s23 = sshll.u32 [#allocation2], 4
      %s24 = int_to_ptr.vmem [resolvable:$true] %s23
      %29 = dma.hbm_to_vmem [thread:$0]  %s1, 4096, %s24, [#allocation3], 256, 256, 16
    $region9: #{tpu_custom_call.1} parent=1 // pred_fallthru
      _
    // Predicated region
    $region10: #{tpu_custom_call.1} parent=1 // pred_check
      _
    $region11: #{tpu_custom_call.1} parent=1 // pred_check_branch
      %31 = sbr.rel (0) target = $region13
    $region12: #{tpu_custom_call.1} parent=1 // pred_region
      _
    $region13: #{tpu_custom_call.1} parent=1 // pred_fallthru
      _
    // Predicated region
    $region14: #{tpu_custom_call.1} parent=1 // pred_check
      _
    $region15: #{tpu_custom_call.1} parent=1 // pred_check_branch
      %33 = sbr.rel (0) target = $region17
    $region16: #{tpu_custom_call.1} parent=1 // pred_region
      %s35 = ssub.s32 8192, 8192
      %36 = vsyncadd [#allocation5], %s35
      %s37 = sshll.u32 [#allocation4], 4
      %s38 = int_to_ptr.vmem [resolvable:$true] %s37
      %43 = dma.hbm_to_vmem [thread:$0]  %s3, 8192, %s38, [#allocation5], 128, 128, 8
    $region17: #{tpu_custom_call.1} parent=1 // pred_fallthru
      _
    // Predicated region
    $region18: #{tpu_custom_call.1} parent=1 // pred_check
      _
    $region19: #{tpu_custom_call.1} parent=1 // pred_check_branch
      %45 = sbr.rel (0) target = $region21
    $region20: #{tpu_custom_call.1} parent=1 // pred_region
      _
    $region21: #{tpu_custom_call.1} parent=1 // pred_fallthru
      _
    // Predicated region
    $region22: #{tpu_custom_call.1} parent=1 // pred_check
      _
    $region23: #{tpu_custom_call.1} parent=1 // pred_check_branch
      %47 = sbr.rel (0) target = $region25
    $region24: #{tpu_custom_call.1} parent=1 // pred_region
      %s49 = ssub.s32 2048, 2048
      %50 = vsyncadd [#allocation5], %s49
      %s51 = sshll.u32 [#allocation6], 4
      %s52 = int_to_ptr.vmem [resolvable:$true] %s51
      %57 = dma.hbm_to_vmem [thread:$0]  %s5, 2048, %s52, [#allocation5], 64, 64, 4
    $region25: #{tpu_custom_call.1} parent=1 // pred_fallthru
      _
    // Predicated region
    $region26: #{tpu_custom_call.1} parent=1 // pred_check
      _
    $region27: #{tpu_custom_call.1} parent=1 // pred_check_branch
      %59 = sbr.rel (0) target = $region29
    $region28: #{tpu_custom_call.1} parent=1 // pred_region
      _
    $region29: #{tpu_custom_call.1} parent=1 // pred_fallthru
      _
    // Predicated region
    $region30: #{tpu_custom_call.1} parent=1 // pred_check
      _
    $region31: #{tpu_custom_call.1} parent=1 // pred_check_branch
      %61 = sbr.rel (0) target = $region33
    $region32: #{tpu_custom_call.1} parent=1 // pred_region
      _
    $region33: #{tpu_custom_call.1} parent=1 // pred_fallthru
      _
    // Predicated region
    $region34: #{tpu_custom_call.1} parent=1 // pred_check
      _
    $region35: #{tpu_custom_call.1} parent=1 // pred_check_branch
      %63 = sbr.rel (0) target = $region37
    $region36: #{tpu_custom_call.1} parent=1 // pred_region
      _
    $region37: #{tpu_custom_call.1} parent=1 // pred_fallthru
      _
    // Predicated region
    $region38: #{tpu_custom_call.1} parent=1 // pred_check
      _
    $region39: #{tpu_custom_call.1} parent=1 // pred_check_branch
      %65 = sbr.rel (0) target = $region41
    $region40: #{tpu_custom_call.1} parent=1 // pred_region
      %66 = dma.done [#allocation3], 4096
    $region41: #{tpu_custom_call.1} parent=1 // pred_fallthru
      _
    // Predicated region
    $region42: #{tpu_custom_call.1} parent=1 // pred_check
      _
    $region43: #{tpu_custom_call.1} parent=1 // pred_check_branch
      %68 = sbr.rel (0) target = $region45
    $region44: #{tpu_custom_call.1} parent=1 // pred_region
      %69 = dma.done [#allocation5], 8192
    $region45: #{tpu_custom_call.1} parent=1 // pred_fallthru
      _
    // Predicated region
    $region46: #{tpu_custom_call.1} parent=1 // pred_check
      _
    $region47: #{tpu_custom_call.1} parent=1 // pred_check_branch
      %71 = sbr.rel (0) target = $region49
    $region48: #{tpu_custom_call.1} parent=1 // pred_region
      %72 = dma.done [#allocation5], 2048
    $region49: #{tpu_custom_call.1} parent=1 // pred_fallthru
      _
    %v74 = vld [vmem:[%s0] sm:$0xf]
    %v75 = vld [vmem:[%s0 + $0x4] sm:$0xf]
    %v76 = vld [vmem:[#allocation2] sm:$0xff]
    %v77 = vld [vmem:[#allocation2 + $0x8] sm:$0xff]
    %v78 = vld [vmem:[#allocation2 + $0x10] sm:$0xff]
    %v79 = vld [vmem:[#allocation2 + $0x18] sm:$0xff]
    %v80 = vld [vmem:[#allocation2 + $0x20] sm:$0xff]
    %v81 = vld [vmem:[#allocation2 + $0x28] sm:$0xff]
    %v82 = vld [vmem:[#allocation2 + $0x30] sm:$0xff]
    %v83 = vld [vmem:[#allocation2 + $0x38] sm:$0xff]
    %v84 = vld [vmem:[#allocation2 + $0x40] sm:$0xff]
    %v85 = vld [vmem:[#allocation2 + $0x48] sm:$0xff]
    %v86 = vld [vmem:[#allocation2 + $0x50] sm:$0xff]
    %v87 = vld [vmem:[#allocation2 + $0x58] sm:$0xff]
    %v88 = vld [vmem:[#allocation2 + $0x60] sm:$0xff]
    %v89 = vld [vmem:[#allocation2 + $0x68] sm:$0xff]
    %v90 = vld [vmem:[#allocation2 + $0x70] sm:$0xff]
    %v91 = vld [vmem:[#allocation2 + $0x78] sm:$0xff]
    %v92 = vld [vmem:[#allocation2 + $0x80] sm:$0xff]
    %v93 = vld [vmem:[#allocation2 + $0x88] sm:$0xff]
    %v94 = vld [vmem:[#allocation2 + $0x90] sm:$0xff]
    %v95 = vld [vmem:[#allocation2 + $0x98] sm:$0xff]
    %v96 = vld [vmem:[#allocation2 + $0xa0] sm:$0xff]
    %v97 = vld [vmem:[#allocation2 + $0xa8] sm:$0xff]
    %v98 = vld [vmem:[#allocation2 + $0xb0] sm:$0xff]
    %v99 = vld [vmem:[#allocation2 + $0xb8] sm:$0xff]
    %v100 = vld [vmem:[#allocation2 + $0xc0] sm:$0xff]
    %v101 = vld [vmem:[#allocation2 + $0xc8] sm:$0xff]
    %v102 = vld [vmem:[#allocation2 + $0xd0] sm:$0xff]
    %v103 = vld [vmem:[#allocation2 + $0xd8] sm:$0xff]
    %v104 = vld [vmem:[#allocation2 + $0xe0] sm:$0xff]
    %v105 = vld [vmem:[#allocation2 + $0xe8] sm:$0xff]
    %v106 = vld [vmem:[#allocation2 + $0xf0] sm:$0xff]
    %v107 = vld [vmem:[#allocation2 + $0xf8] sm:$0xff]
    %v108 = vld [vmem:[%s2] sm:$0xf]
    %v110 = vlaneseq
    %v111 = vshrl.u32 %v110, 7
    %v112 = vsub.s32 0, %v111
    %v113 = vrot.slane %v108, %v112
    %v114 = vlaneseq
    %v115 = vshrl.u32 %v114, 7
    %v116 = vsub.s32 1, %v115
    %v117 = vrot.slane %v108, %v116
    %v118 = vlaneseq
    %v119 = vshrl.u32 %v118, 7
    %v120 = vsub.s32 2, %v119
    %v121 = vrot.slane %v108, %v120
    %v122 = vlaneseq
    %v123 = vshrl.u32 %v122, 7
    %v124 = vsub.s32 3, %v123
    %v125 = vrot.slane %v108, %v124
    %v132 = vunpack.c.l.b16 %v74
    %v133 = vunpack.c.l.b16 %v75
    %v134 = vpack.c.b16 %v133, %v132
    %v168 = vunpack.c.l.b16 %v76
    %v169 = vunpack.c.h.b16 %v76
    %v170 = vunpack.c.l.b16 %v77
    %v171 = vunpack.c.h.b16 %v77
    %v172 = vunpack.c.l.b16 %v78
    %v173 = vunpack.c.h.b16 %v78
    %v174 = vunpack.c.l.b16 %v79
    %v175 = vunpack.c.h.b16 %v79
    %v176 = vunpack.c.l.b16 %v80
    %v177 = vunpack.c.h.b16 %v80
    %v178 = vunpack.c.l.b16 %v81
    %v179 = vunpack.c.h.b16 %v81
    %v180 = vunpack.c.l.b16 %v82
    %v181 = vunpack.c.h.b16 %v82
    %v182 = vunpack.c.l.b16 %v83
    %v183 = vunpack.c.h.b16 %v83
    %v184 = vunpack.c.l.b16 %v84
    %v185 = vunpack.c.h.b16 %v84
    %v186 = vunpack.c.l.b16 %v85
    %v187 = vunpack.c.h.b16 %v85
    %v188 = vunpack.c.l.b16 %v86
    %v189 = vunpack.c.h.b16 %v86
    %v190 = vunpack.c.l.b16 %v87
    %v191 = vunpack.c.h.b16 %v87
    %v192 = vunpack.c.l.b16 %v88
    %v193 = vunpack.c.h.b16 %v88
    %v194 = vunpack.c.l.b16 %v89
    %v195 = vunpack.c.h.b16 %v89
    %v196 = vunpack.c.l.b16 %v90
    %v197 = vunpack.c.h.b16 %v90
    %v198 = vunpack.c.l.b16 %v91
    %v199 = vunpack.c.h.b16 %v91
    %v200 = vunpack.c.l.b16 %v92
    %v201 = vunpack.c.h.b16 %v92
    %v202 = vunpack.c.l.b16 %v93
    %v203 = vunpack.c.h.b16 %v93
    %v204 = vunpack.c.l.b16 %v94
    %v205 = vunpack.c.h.b16 %v94
    %v206 = vunpack.c.l.b16 %v95
    %v207 = vunpack.c.h.b16 %v95
    %v208 = vunpack.c.l.b16 %v96
    %v209 = vunpack.c.h.b16 %v96
    %v210 = vunpack.c.l.b16 %v97
    %v211 = vunpack.c.h.b16 %v97
    %v212 = vunpack.c.l.b16 %v98
    %v213 = vunpack.c.h.b16 %v98
    %v214 = vunpack.c.l.b16 %v99
    %v215 = vunpack.c.h.b16 %v99
    %v216 = vunpack.c.l.b16 %v100
    %v217 = vunpack.c.h.b16 %v100
    %v218 = vunpack.c.l.b16 %v101
    %v219 = vunpack.c.h.b16 %v101
    %v220 = vunpack.c.l.b16 %v102
    %v221 = vunpack.c.h.b16 %v102
    %v222 = vunpack.c.l.b16 %v103
    %v223 = vunpack.c.h.b16 %v103
    %v224 = vunpack.c.l.b16 %v104
    %v225 = vunpack.c.h.b16 %v104
    %v226 = vunpack.c.l.b16 %v105
    %v227 = vunpack.c.h.b16 %v105
    %v228 = vunpack.c.l.b16 %v106
    %v229 = vunpack.c.h.b16 %v106
    %v230 = vunpack.c.l.b16 %v107
    %v231 = vunpack.c.h.b16 %v107
    %v232 = vpack.c.b16 %v172, %v168
    %v233 = vpack.c.b16 %v173, %v169
    %v234 = vpack.c.b16 %v174, %v170
    %v235 = vpack.c.b16 %v175, %v171
    %v236 = vpack.c.b16 %v180, %v176
    %v237 = vpack.c.b16 %v181, %v177
    %v238 = vpack.c.b16 %v182, %v178
    %v239 = vpack.c.b16 %v183, %v179
    %v240 = vpack.c.b16 %v188, %v184
    %v241 = vpack.c.b16 %v189, %v185
    %v242 = vpack.c.b16 %v190, %v186
    %v243 = vpack.c.b16 %v191, %v187
    %v244 = vpack.c.b16 %v196, %v192
    %v245 = vpack.c.b16 %v197, %v193
    %v246 = vpack.c.b16 %v198, %v194
    %v247 = vpack.c.b16 %v199, %v195
    %v248 = vpack.c.b16 %v204, %v200
    %v249 = vpack.c.b16 %v205, %v201
    %v250 = vpack.c.b16 %v206, %v202
    %v251 = vpack.c.b16 %v207, %v203
    %v252 = vpack.c.b16 %v212, %v208
    %v253 = vpack.c.b16 %v213, %v209
    %v254 = vpack.c.b16 %v214, %v210
    %v255 = vpack.c.b16 %v215, %v211
    %v256 = vpack.c.b16 %v220, %v216
    %v257 = vpack.c.b16 %v221, %v217
    %v258 = vpack.c.b16 %v222, %v218
    %v259 = vpack.c.b16 %v223, %v219
    %v260 = vpack.c.b16 %v228, %v224
    %v261 = vpack.c.b16 %v229, %v225
    %v262 = vpack.c.b16 %v230, %v226
    %v263 = vpack.c.b16 %v231, %v227
    %296 = vmatprep.subr.bf16.mxu0 %v233
    %297 = vmatpush1.bf16.msra.mxu0 %v232
    %298 = vmatprep.subr.bf16.mxu0 %v237
    %299 = vmatpush1.bf16.msra.mxu0 %v236
    %300 = vmatprep.subr.bf16.mxu0 %v241
    %301 = vmatpush1.bf16.msra.mxu0 %v240
    %302 = vmatprep.subr.bf16.mxu0 %v245
    %303 = vmatpush1.bf16.msra.mxu0 %v244
    %304 = vmatprep.subr.bf16.mxu0 %v249
    %305 = vmatpush1.bf16.msra.mxu0 %v248
    %306 = vmatprep.subr.bf16.mxu0 %v253
    %307 = vmatpush1.bf16.msra.mxu0 %v252
    %308 = vmatprep.subr.bf16.mxu0 %v257
    %309 = vmatpush1.bf16.msra.mxu0 %v256
    %310 = vmatprep.subr.bf16.mxu0 %v261
    %311 = vmatpush1.bf16.msra.mxu0 %v260
    %312 = vmatprep.subr.bf16.mxu0 0
    %313 = vmatpush1.bf16.msra.mxu0 0
    %314 = vmatprep.subr.bf16.mxu0 0
    %315 = vmatpush1.bf16.msra.mxu0 0
    %316 = vmatprep.subr.bf16.mxu0 0
    %317 = vmatpush1.bf16.msra.mxu0 0
    %318 = vmatprep.subr.bf16.mxu0 0
    %319 = vmatpush1.bf16.msra.mxu0 0
    %320 = vmatprep.subr.bf16.mxu0 0
    %321 = vmatpush1.bf16.msra.mxu0 0
    %322 = vmatprep.subr.bf16.mxu0 0
    %323 = vmatpush1.bf16.msra.mxu0 0
    %324 = vmatprep.subr.bf16.mxu0 0
    %325 = vmatpush1.bf16.msra.mxu0 0
    %326 = vmatprep.subr.bf16.mxu0 0
    %327 = vmatpush1.bf16.msra.mxu0 0
    %328 = vmatprep.mubr.bf16.mxu0 0
    %329 = vmatmul.mubr.bf16.gmra.mrb[0].mxu0 %v134
    %v330 = vpop.f32.mrb[0].mxu0
    %v331 = vadd.f32 %v113, %v330
    %v332 = vpop.f32.mrb[0].mxu0
    %v333 = vadd.f32 %v117, %v332
    %v334 = vpop.f32.mrb[0].mxu0
    %v335 = vadd.f32 %v113, %v334
    %v336 = vpop.f32.mrb[0].mxu0
    %v337 = vadd.f32 %v117, %v336
    %338 = vdwg.mxu0
    %339 = vmatprep.subr.bf16.mxu0 %v235
    %340 = vmatpush1.bf16.msra.mxu0 %v234
    %341 = vmatprep.subr.bf16.mxu0 %v239
    %342 = vmatpush1.bf16.msra.mxu0 %v238
    %343 = vmatprep.subr.bf16.mxu0 %v243
    %344 = vmatpush1.bf16.msra.mxu0 %v242
    %345 = vmatprep.subr.bf16.mxu0 %v247
    %346 = vmatpush1.bf16.msra.mxu0 %v246
    %347 = vmatprep.subr.bf16.mxu0 %v251
    %348 = vmatpush1.bf16.msra.mxu0 %v250
    %349 = vmatprep.subr.bf16.mxu0 %v255
    %350 = vmatpush1.bf16.msra.mxu0 %v254
    %351 = vmatprep.subr.bf16.mxu0 %v259
    %352 = vmatpush1.bf16.msra.mxu0 %v258
    %353 = vmatprep.subr.bf16.mxu0 %v263
    %354 = vmatpush1.bf16.msra.mxu0 %v262
    %355 = vmatprep.subr.bf16.mxu0 0
    %356 = vmatpush1.bf16.msra.mxu0 0
    %357 = vmatprep.subr.bf16.mxu0 0
    %358 = vmatpush1.bf16.msra.mxu0 0
    %359 = vmatprep.subr.bf16.mxu0 0
    %360 = vmatpush1.bf16.msra.mxu0 0
    %361 = vmatprep.subr.bf16.mxu0 0
    %362 = vmatpush1.bf16.msra.mxu0 0
    %363 = vmatprep.subr.bf16.mxu0 0
    %364 = vmatpush1.bf16.msra.mxu0 0
    %365 = vmatprep.subr.bf16.mxu0 0
    %366 = vmatpush1.bf16.msra.mxu0 0
    %367 = vmatprep.subr.bf16.mxu0 0
    %368 = vmatpush1.bf16.msra.mxu0 0
    %369 = vmatprep.subr.bf16.mxu0 0
    %370 = vmatpush1.bf16.msra.mxu0 0
    %371 = vmatprep.mubr.bf16.mxu0 0
    %372 = vmatmul.mubr.bf16.gmra.mrb[0].mxu0 %v134
    %v373 = vpop.f32.mrb[0].mxu0
    %v374 = vadd.f32 %v121, %v373
    %v375 = vpop.f32.mrb[0].mxu0
    %v376 = vadd.f32 %v125, %v375
    %v377 = vpop.f32.mrb[0].mxu0
    %v378 = vadd.f32 %v121, %v377
    %v379 = vpop.f32.mrb[0].mxu0
    %v380 = vadd.f32 %v125, %v379
    %381 = vdwg.mxu0
    %v382 = vmax.f32 %v331, 0.0
    %v383 = vmax.f32 %v333, 0.0
    %v384 = vmax.f32 %v374, 0.0
    %v385 = vmax.f32 %v376, 0.0
    %v386 = vmax.f32 %v335, 0.0
    %v387 = vmax.f32 %v337, 0.0
    %v388 = vmax.f32 %v378, 0.0
    %v389 = vmax.f32 %v380, 0.0
    %v390 = vpack.c.bf16 %v386, %v382
    %v391 = vpack.c.bf16 %v387, %v383
    %v392 = vpack.c.bf16 %v388, %v384
    %v393 = vpack.c.bf16 %v389, %v385
    %v394 = vld [vmem:[#allocation4] sm:$0xff]
    %v395 = vld [vmem:[#allocation4 + $0x8] sm:$0xff]
    %v396 = vld [vmem:[#allocation4 + $0x10] sm:$0xff]
    %v397 = vld [vmem:[#allocation4 + $0x18] sm:$0xff]
    %v398 = vld [vmem:[#allocation4 + $0x20] sm:$0xff]
    %v399 = vld [vmem:[#allocation4 + $0x28] sm:$0xff]
    %v400 = vld [vmem:[#allocation4 + $0x30] sm:$0xff]
    %v401 = vld [vmem:[#allocation4 + $0x38] sm:$0xff]
    %v402 = vld [vmem:[#allocation4 + $0x40] sm:$0xff]
    %v403 = vld [vmem:[#allocation4 + $0x48] sm:$0xff]
    %v404 = vld [vmem:[#allocation4 + $0x50] sm:$0xff]
    %v405 = vld [vmem:[#allocation4 + $0x58] sm:$0xff]
    %v406 = vld [vmem:[#allocation4 + $0x60] sm:$0xff]
    %v407 = vld [vmem:[#allocation4 + $0x68] sm:$0xff]
    %v408 = vld [vmem:[#allocation4 + $0x70] sm:$0xff]
    %v409 = vld [vmem:[#allocation4 + $0x78] sm:$0xff]
    %v410 = vld [vmem:[#allocation4 + $0x80] sm:$0xff]
    %v411 = vld [vmem:[#allocation4 + $0x88] sm:$0xff]
    %v412 = vld [vmem:[#allocation4 + $0x90] sm:$0xff]
    %v413 = vld [vmem:[#allocation4 + $0x98] sm:$0xff]
    %v414 = vld [vmem:[#allocation4 + $0xa0] sm:$0xff]
    %v415 = vld [vmem:[#allocation4 + $0xa8] sm:$0xff]
    %v416 = vld [vmem:[#allocation4 + $0xb0] sm:$0xff]
    %v417 = vld [vmem:[#allocation4 + $0xb8] sm:$0xff]
    %v418 = vld [vmem:[#allocation4 + $0xc0] sm:$0xff]
    %v419 = vld [vmem:[#allocation4 + $0xc8] sm:$0xff]
    %v420 = vld [vmem:[#allocation4 + $0xd0] sm:$0xff]
    %v421 = vld [vmem:[#allocation4 + $0xd8] sm:$0xff]
    %v422 = vld [vmem:[#allocation4 + $0xe0] sm:$0xff]
    %v423 = vld [vmem:[#allocation4 + $0xe8] sm:$0xff]
    %v424 = vld [vmem:[#allocation4 + $0xf0] sm:$0xff]
    %v425 = vld [vmem:[#allocation4 + $0xf8] sm:$0xff]
    %v426 = vld [vmem:[#allocation4 + $0x100] sm:$0xff]
    %v427 = vld [vmem:[#allocation4 + $0x108] sm:$0xff]
    %v428 = vld [vmem:[#allocation4 + $0x110] sm:$0xff]
    %v429 = vld [vmem:[#allocation4 + $0x118] sm:$0xff]
    %v430 = vld [vmem:[#allocation4 + $0x120] sm:$0xff]
    %v431 = vld [vmem:[#allocation4 + $0x128] sm:$0xff]
    %v432 = vld [vmem:[#allocation4 + $0x130] sm:$0xff]
    %v433 = vld [vmem:[#allocation4 + $0x138] sm:$0xff]
    %v434 = vld [vmem:[#allocation4 + $0x140] sm:$0xff]
    %v435 = vld [vmem:[#allocation4 + $0x148] sm:$0xff]
    %v436 = vld [vmem:[#allocation4 + $0x150] sm:$0xff]
    %v437 = vld [vmem:[#allocation4 + $0x158] sm:$0xff]
    %v438 = vld [vmem:[#allocation4 + $0x160] sm:$0xff]
    %v439 = vld [vmem:[#allocation4 + $0x168] sm:$0xff]
    %v440 = vld [vmem:[#allocation4 + $0x170] sm:$0xff]
    %v441 = vld [vmem:[#allocation4 + $0x178] sm:$0xff]
    %v442 = vld [vmem:[#allocation4 + $0x180] sm:$0xff]
    %v443 = vld [vmem:[#allocation4 + $0x188] sm:$0xff]
    %v444 = vld [vmem:[#allocation4 + $0x190] sm:$0xff]
    %v445 = vld [vmem:[#allocation4 + $0x198] sm:$0xff]
    %v446 = vld [vmem:[#allocation4 + $0x1a0] sm:$0xff]
    %v447 = vld [vmem:[#allocation4 + $0x1a8] sm:$0xff]
    %v448 = vld [vmem:[#allocation4 + $0x1b0] sm:$0xff]
    %v449 = vld [vmem:[#allocation4 + $0x1b8] sm:$0xff]
    %v450 = vld [vmem:[#allocation4 + $0x1c0] sm:$0xff]
    %v451 = vld [vmem:[#allocation4 + $0x1c8] sm:$0xff]
    %v452 = vld [vmem:[#allocation4 + $0x1d0] sm:$0xff]
    %v453 = vld [vmem:[#allocation4 + $0x1d8] sm:$0xff]
    %v454 = vld [vmem:[#allocation4 + $0x1e0] sm:$0xff]
    %v455 = vld [vmem:[#allocation4 + $0x1e8] sm:$0xff]
    %v456 = vld [vmem:[#allocation4 + $0x1f0] sm:$0xff]
    %v457 = vld [vmem:[#allocation4 + $0x1f8] sm:$0xff]
    %v458 = vld [vmem:[%s4] sm:$0x3]
    %v460 = vlaneseq
    %v461 = vshrl.u32 %v460, 7
    %v462 = vsub.s32 0, %v461
    %v463 = vrot.slane %v458, %v462
    %v464 = vlaneseq
    %v465 = vshrl.u32 %v464, 7
    %v466 = vsub.s32 1, %v465
    %v467 = vrot.slane %v458, %v466
    %v534 = vunpack.c.l.b16 %v394
    %v535 = vunpack.c.h.b16 %v394
    %v536 = vunpack.c.l.b16 %v395
    %v537 = vunpack.c.h.b16 %v395
    %v538 = vunpack.c.l.b16 %v396
    %v539 = vunpack.c.h.b16 %v396
    %v540 = vunpack.c.l.b16 %v397
    %v541 = vunpack.c.h.b16 %v397
    %v542 = vunpack.c.l.b16 %v398
    %v543 = vunpack.c.h.b16 %v398
    %v544 = vunpack.c.l.b16 %v399
    %v545 = vunpack.c.h.b16 %v399
    %v546 = vunpack.c.l.b16 %v400
    %v547 = vunpack.c.h.b16 %v400
    %v548 = vunpack.c.l.b16 %v401
    %v549 = vunpack.c.h.b16 %v401
    %v550 = vunpack.c.l.b16 %v402
    %v551 = vunpack.c.h.b16 %v402
    %v552 = vunpack.c.l.b16 %v403
    %v553 = vunpack.c.h.b16 %v403
    %v554 = vunpack.c.l.b16 %v404
    %v555 = vunpack.c.h.b16 %v404
    %v556 = vunpack.c.l.b16 %v405
    %v557 = vunpack.c.h.b16 %v405
    %v558 = vunpack.c.l.b16 %v406
    %v559 = vunpack.c.h.b16 %v406
    %v560 = vunpack.c.l.b16 %v407
    %v561 = vunpack.c.h.b16 %v407
    %v562 = vunpack.c.l.b16 %v408
    %v563 = vunpack.c.h.b16 %v408
    %v564 = vunpack.c.l.b16 %v409
    %v565 = vunpack.c.h.b16 %v409
    %v566 = vunpack.c.l.b16 %v410
    %v567 = vunpack.c.h.b16 %v410
    %v568 = vunpack.c.l.b16 %v411
    %v569 = vunpack.c.h.b16 %v411
    %v570 = vunpack.c.l.b16 %v412
    %v571 = vunpack.c.h.b16 %v412
    %v572 = vunpack.c.l.b16 %v413
    %v573 = vunpack.c.h.b16 %v413
    %v574 = vunpack.c.l.b16 %v414
    %v575 = vunpack.c.h.b16 %v414
    %v576 = vunpack.c.l.b16 %v415
    %v577 = vunpack.c.h.b16 %v415
    %v578 = vunpack.c.l.b16 %v416
    %v579 = vunpack.c.h.b16 %v416
    %v580 = vunpack.c.l.b16 %v417
    %v581 = vunpack.c.h.b16 %v417
    %v582 = vunpack.c.l.b16 %v418
    %v583 = vunpack.c.h.b16 %v418
    %v584 = vunpack.c.l.b16 %v419
    %v585 = vunpack.c.h.b16 %v419
    %v586 = vunpack.c.l.b16 %v420
    %v587 = vunpack.c.h.b16 %v420
    %v588 = vunpack.c.l.b16 %v421
    %v589 = vunpack.c.h.b16 %v421
    %v590 = vunpack.c.l.b16 %v422
    %v591 = vunpack.c.h.b16 %v422
    %v592 = vunpack.c.l.b16 %v423
    %v593 = vunpack.c.h.b16 %v423
    %v594 = vunpack.c.l.b16 %v424
    %v595 = vunpack.c.h.b16 %v424
    %v596 = vunpack.c.l.b16 %v425
    %v597 = vunpack.c.h.b16 %v425
    %v598 = vunpack.c.l.b16 %v426
    %v599 = vunpack.c.h.b16 %v426
    %v600 = vunpack.c.l.b16 %v427
    %v601 = vunpack.c.h.b16 %v427
    %v602 = vunpack.c.l.b16 %v428
    %v603 = vunpack.c.h.b16 %v428
    %v604 = vunpack.c.l.b16 %v429
    %v605 = vunpack.c.h.b16 %v429
    %v606 = vunpack.c.l.b16 %v430
    %v607 = vunpack.c.h.b16 %v430
    %v608 = vunpack.c.l.b16 %v431
    %v609 = vunpack.c.h.b16 %v431
    %v610 = vunpack.c.l.b16 %v432
    %v611 = vunpack.c.h.b16 %v432
    %v612 = vunpack.c.l.b16 %v433
    %v613 = vunpack.c.h.b16 %v433
    %v614 = vunpack.c.l.b16 %v434
    %v615 = vunpack.c.h.b16 %v434
    %v616 = vunpack.c.l.b16 %v435
    %v617 = vunpack.c.h.b16 %v435
    %v618 = vunpack.c.l.b16 %v436
    %v619 = vunpack.c.h.b16 %v436
    %v620 = vunpack.c.l.b16 %v437
    %v621 = vunpack.c.h.b16 %v437
    %v622 = vunpack.c.l.b16 %v438
    %v623 = vunpack.c.h.b16 %v438
    %v624 = vunpack.c.l.b16 %v439
    %v625 = vunpack.c.h.b16 %v439
    %v626 = vunpack.c.l.b16 %v440
    %v627 = vunpack.c.h.b16 %v440
    %v628 = vunpack.c.l.b16 %v441
    %v629 = vunpack.c.h.b16 %v441
    %v630 = vunpack.c.l.b16 %v442
    %v631 = vunpack.c.h.b16 %v442
    %v632 = vunpack.c.l.b16 %v443
    %v633 = vunpack.c.h.b16 %v443
    %v634 = vunpack.c.l.b16 %v444
    %v635 = vunpack.c.h.b16 %v444
    %v636 = vunpack.c.l.b16 %v445
    %v637 = vunpack.c.h.b16 %v445
    %v638 = vunpack.c.l.b16 %v446
    %v639 = vunpack.c.h.b16 %v446
    %v640 = vunpack.c.l.b16 %v447
    %v641 = vunpack.c.h.b16 %v447
    %v642 = vunpack.c.l.b16 %v448
    %v643 = vunpack.c.h.b16 %v448
    %v644 = vunpack.c.l.b16 %v449
    %v645 = vunpack.c.h.b16 %v449
    %v646 = vunpack.c.l.b16 %v450
    %v647 = vunpack.c.h.b16 %v450
    %v648 = vunpack.c.l.b16 %v451
    %v649 = vunpack.c.h.b16 %v451
    %v650 = vunpack.c.l.b16 %v452
    %v651 = vunpack.c.h.b16 %v452
    %v652 = vunpack.c.l.b16 %v453
    %v653 = vunpack.c.h.b16 %v453
    %v654 = vunpack.c.l.b16 %v454
    %v655 = vunpack.c.h.b16 %v454
    %v656 = vunpack.c.l.b16 %v455
    %v657 = vunpack.c.h.b16 %v455
    %v658 = vunpack.c.l.b16 %v456
    %v659 = vunpack.c.h.b16 %v456
    %v660 = vunpack.c.l.b16 %v457
    %v661 = vunpack.c.h.b16 %v457
    %v662 = vpack.c.b16 %v536, %v534
    %v663 = vpack.c.b16 %v537, %v535
    %v664 = vpack.c.b16 %v540, %v538
    %v665 = vpack.c.b16 %v541, %v539
    %v666 = vpack.c.b16 %v544, %v542
    %v667 = vpack.c.b16 %v545, %v543
    %v668 = vpack.c.b16 %v548, %v546
    %v669 = vpack.c.b16 %v549, %v547
    %v670 = vpack.c.b16 %v552, %v550
    %v671 = vpack.c.b16 %v553, %v551
    %v672 = vpack.c.b16 %v556, %v554
    %v673 = vpack.c.b16 %v557, %v555
    %v674 = vpack.c.b16 %v560, %v558
    %v675 = vpack.c.b16 %v561, %v559
    %v676 = vpack.c.b16 %v564, %v562
    %v677 = vpack.c.b16 %v565, %v563
    %v678 = vpack.c.b16 %v568, %v566
    %v679 = vpack.c.b16 %v569, %v567
    %v680 = vpack.c.b16 %v572, %v570
    %v681 = vpack.c.b16 %v573, %v571
    %v682 = vpack.c.b16 %v576, %v574
    %v683 = vpack.c.b16 %v577, %v575
    %v684 = vpack.c.b16 %v580, %v578
    %v685 = vpack.c.b16 %v581, %v579
    %v686 = vpack.c.b16 %v584, %v582
    %v687 = vpack.c.b16 %v585, %v583
    %v688 = vpack.c.b16 %v588, %v586
    %v689 = vpack.c.b16 %v589, %v587
    %v690 = vpack.c.b16 %v592, %v590
    %v691 = vpack.c.b16 %v593, %v591
    %v692 = vpack.c.b16 %v596, %v594
    %v693 = vpack.c.b16 %v597, %v595
    %v694 = vpack.c.b16 %v600, %v598
    %v695 = vpack.c.b16 %v601, %v599
    %v696 = vpack.c.b16 %v604, %v602
    %v697 = vpack.c.b16 %v605, %v603
    %v698 = vpack.c.b16 %v608, %v606
    %v699 = vpack.c.b16 %v609, %v607
    %v700 = vpack.c.b16 %v612, %v610
    %v701 = vpack.c.b16 %v613, %v611
    %v702 = vpack.c.b16 %v616, %v614
    %v703 = vpack.c.b16 %v617, %v615
    %v704 = vpack.c.b16 %v620, %v618
    %v705 = vpack.c.b16 %v621, %v619
    %v706 = vpack.c.b16 %v624, %v622
    %v707 = vpack.c.b16 %v625, %v623
    %v708 = vpack.c.b16 %v628, %v626
    %v709 = vpack.c.b16 %v629, %v627
    %v710 = vpack.c.b16 %v632, %v630
    %v711 = vpack.c.b16 %v633, %v631
    %v712 = vpack.c.b16 %v636, %v634
    %v713 = vpack.c.b16 %v637, %v635
    %v714 = vpack.c.b16 %v640, %v638
    %v715 = vpack.c.b16 %v641, %v639
    %v716 = vpack.c.b16 %v644, %v642
    %v717 = vpack.c.b16 %v645, %v643
    %v718 = vpack.c.b16 %v648, %v646
    %v719 = vpack.c.b16 %v649, %v647
    %v720 = vpack.c.b16 %v652, %v650
    %v721 = vpack.c.b16 %v653, %v651
    %v722 = vpack.c.b16 %v656, %v654
    %v723 = vpack.c.b16 %v657, %v655
    %v724 = vpack.c.b16 %v660, %v658
    %v725 = vpack.c.b16 %v661, %v659
    %790 = vmatprep.subr.bf16.mxu0 %v663
    %791 = vmatpush1.bf16.msra.mxu0 %v662
    %792 = vmatprep.subr.bf16.mxu0 %v665
    %793 = vmatpush1.bf16.msra.mxu0 %v664
    %794 = vmatprep.subr.bf16.mxu0 %v667
    %795 = vmatpush1.bf16.msra.mxu0 %v666
    %796 = vmatprep.subr.bf16.mxu0 %v669
    %797 = vmatpush1.bf16.msra.mxu0 %v668
    %798 = vmatprep.subr.bf16.mxu0 %v671
    %799 = vmatpush1.bf16.msra.mxu0 %v670
    %800 = vmatprep.subr.bf16.mxu0 %v673
    %801 = vmatpush1.bf16.msra.mxu0 %v672
    %802 = vmatprep.subr.bf16.mxu0 %v675
    %803 = vmatpush1.bf16.msra.mxu0 %v674
    %804 = vmatprep.subr.bf16.mxu0 %v677
    %805 = vmatpush1.bf16.msra.mxu0 %v676
    %806 = vmatprep.subr.bf16.mxu0 %v679
    %807 = vmatpush1.bf16.msra.mxu0 %v678
    %808 = vmatprep.subr.bf16.mxu0 %v681
    %809 = vmatpush1.bf16.msra.mxu0 %v680
    %810 = vmatprep.subr.bf16.mxu0 %v683
    %811 = vmatpush1.bf16.msra.mxu0 %v682
    %812 = vmatprep.subr.bf16.mxu0 %v685
    %813 = vmatpush1.bf16.msra.mxu0 %v684
    %814 = vmatprep.subr.bf16.mxu0 %v687
    %815 = vmatpush1.bf16.msra.mxu0 %v686
    %816 = vmatprep.subr.bf16.mxu0 %v689
    %817 = vmatpush1.bf16.msra.mxu0 %v688
    %818 = vmatprep.subr.bf16.mxu0 %v691
    %819 = vmatpush1.bf16.msra.mxu0 %v690
    %820 = vmatprep.subr.bf16.mxu0 %v693
    %821 = vmatpush1.bf16.msra.mxu0 %v692
    %822 = vmatprep.mubr.bf16.mxu0 %v391
    %823 = vmatmul.mubr.bf16.gmra.mrb[0].mxu0 %v390
    %v824 = vpop.f32.mrb[0].mxu0
    %v825 = vadd.f32 %v463, %v824
    %v826 = vpop.f32.mrb[0].mxu0
    %v827 = vadd.f32 %v467, %v826
    %v828 = vpop.f32.mrb[0].mxu0
    %v829 = vadd.f32 %v463, %v828
    %v830 = vpop.f32.mrb[0].mxu0
    %v831 = vadd.f32 %v467, %v830
    %832 = vdwg.mxu0
    %833 = vmatprep.subr.bf16.mxu0 %v695
    %834 = vmatpush1.bf16.msra.mxu0 %v694
    %835 = vmatprep.subr.bf16.mxu0 %v697
    %836 = vmatpush1.bf16.msra.mxu0 %v696
    %837 = vmatprep.subr.bf16.mxu0 %v699
    %838 = vmatpush1.bf16.msra.mxu0 %v698
    %839 = vmatprep.subr.bf16.mxu0 %v701
    %840 = vmatpush1.bf16.msra.mxu0 %v700
    %841 = vmatprep.subr.bf16.mxu0 %v703
    %842 = vmatpush1.bf16.msra.mxu0 %v702
    %843 = vmatprep.subr.bf16.mxu0 %v705
    %844 = vmatpush1.bf16.msra.mxu0 %v704
    %845 = vmatprep.subr.bf16.mxu0 %v707
    %846 = vmatpush1.bf16.msra.mxu0 %v706
    %847 = vmatprep.subr.bf16.mxu0 %v709
    %848 = vmatpush1.bf16.msra.mxu0 %v708
    %849 = vmatprep.subr.bf16.mxu0 %v711
    %850 = vmatpush1.bf16.msra.mxu0 %v710
    %851 = vmatprep.subr.bf16.mxu0 %v713
    %852 = vmatpush1.bf16.msra.mxu0 %v712
    %853 = vmatprep.subr.bf16.mxu0 %v715
    %854 = vmatpush1.bf16.msra.mxu0 %v714
    %855 = vmatprep.subr.bf16.mxu0 %v717
    %856 = vmatpush1.bf16.msra.mxu0 %v716
    %857 = vmatprep.subr.bf16.mxu0 %v719
    %858 = vmatpush1.bf16.msra.mxu0 %v718
    %859 = vmatprep.subr.bf16.mxu0 %v721
    %860 = vmatpush1.bf16.msra.mxu0 %v720
    %861 = vmatprep.subr.bf16.mxu0 %v723
    %862 = vmatpush1.bf16.msra.mxu0 %v722
    %863 = vmatprep.subr.bf16.mxu0 %v725
    %864 = vmatpush1.bf16.msra.mxu0 %v724
    %865 = vmatprep.mubr.bf16.mxu0 %v393
    %866 = vmatmul.mubr.bf16.gmra.mrb[0].mxu0 %v392
    %v867 = vpop.f32.mrb[0].mxu0
    %v868 = vadd.f32 %v825, %v867
    %v869 = vpop.f32.mrb[0].mxu0
    %v870 = vadd.f32 %v827, %v869
    %v871 = vpop.f32.mrb[0].mxu0
    %v872 = vadd.f32 %v829, %v871
    %v873 = vpop.f32.mrb[0].mxu0
    %v874 = vadd.f32 %v831, %v873
    %875 = vdwg.mxu0
    %v876 = vmax.f32 %v868, 0.0
    %v877 = vmax.f32 %v870, 0.0
    %v878 = vmax.f32 %v872, 0.0
    %v879 = vmax.f32 %v874, 0.0
    %v880 = vpack.c.bf16 %v878, %v876
    %v881 = vpack.c.bf16 %v879, %v877
    %v882 = vld [vmem:[#allocation6] sm:$0xf]
    %v883 = vld [vmem:[#allocation6 + $0x4] sm:$0xf]
    %v884 = vld [vmem:[#allocation6 + $0x8] sm:$0xf]
    %v885 = vld [vmem:[#allocation6 + $0xc] sm:$0xf]
    %v886 = vld [vmem:[#allocation6 + $0x10] sm:$0xf]
    %v887 = vld [vmem:[#allocation6 + $0x14] sm:$0xf]
    %v888 = vld [vmem:[#allocation6 + $0x18] sm:$0xf]
    %v889 = vld [vmem:[#allocation6 + $0x1c] sm:$0xf]
    %v890 = vld [vmem:[#allocation6 + $0x20] sm:$0xf]
    %v891 = vld [vmem:[#allocation6 + $0x24] sm:$0xf]
    %v892 = vld [vmem:[#allocation6 + $0x28] sm:$0xf]
    %v893 = vld [vmem:[#allocation6 + $0x2c] sm:$0xf]
    %v894 = vld [vmem:[#allocation6 + $0x30] sm:$0xf]
    %v895 = vld [vmem:[#allocation6 + $0x34] sm:$0xf]
    %v896 = vld [vmem:[#allocation6 + $0x38] sm:$0xf]
    %v897 = vld [vmem:[#allocation6 + $0x3c] sm:$0xf]
    %v898 = vld [vmem:[#allocation6 + $0x40] sm:$0xf]
    %v899 = vld [vmem:[#allocation6 + $0x44] sm:$0xf]
    %v900 = vld [vmem:[#allocation6 + $0x48] sm:$0xf]
    %v901 = vld [vmem:[#allocation6 + $0x4c] sm:$0xf]
    %v902 = vld [vmem:[#allocation6 + $0x50] sm:$0xf]
    %v903 = vld [vmem:[#allocation6 + $0x54] sm:$0xf]
    %v904 = vld [vmem:[#allocation6 + $0x58] sm:$0xf]
    %v905 = vld [vmem:[#allocation6 + $0x5c] sm:$0xf]
    %v906 = vld [vmem:[#allocation6 + $0x60] sm:$0xf]
    %v907 = vld [vmem:[#allocation6 + $0x64] sm:$0xf]
    %v908 = vld [vmem:[#allocation6 + $0x68] sm:$0xf]
    %v909 = vld [vmem:[#allocation6 + $0x6c] sm:$0xf]
    %v910 = vld [vmem:[#allocation6 + $0x70] sm:$0xf]
    %v911 = vld [vmem:[#allocation6 + $0x74] sm:$0xf]
    %v912 = vld [vmem:[#allocation6 + $0x78] sm:$0xf]
    %v913 = vld [vmem:[#allocation6 + $0x7c] sm:$0xf]
    %v914 = vld [vmem:[%s6] sm:$0x1]
    %v916 = vlaneseq
    %v917 = vshrl.u32 %v916, 7
    %v918 = vsub.s32 0, %v917
    %v919 = vrot.slane %v914, %v918
    %v953 = vunpack.c.l.b16 %v882
    %v954 = vunpack.c.l.b16 %v883
    %v955 = vunpack.c.l.b16 %v884
    %v956 = vunpack.c.l.b16 %v885
    %v957 = vunpack.c.l.b16 %v886
    %v958 = vunpack.c.l.b16 %v887
    %v959 = vunpack.c.l.b16 %v888
    %v960 = vunpack.c.l.b16 %v889
    %v961 = vunpack.c.l.b16 %v890
    %v962 = vunpack.c.l.b16 %v891
    %v963 = vunpack.c.l.b16 %v892
    %v964 = vunpack.c.l.b16 %v893
    %v965 = vunpack.c.l.b16 %v894
    %v966 = vunpack.c.l.b16 %v895
    %v967 = vunpack.c.l.b16 %v896
    %v968 = vunpack.c.l.b16 %v897
    %v969 = vunpack.c.l.b16 %v898
    %v970 = vunpack.c.l.b16 %v899
    %v971 = vunpack.c.l.b16 %v900
    %v972 = vunpack.c.l.b16 %v901
    %v973 = vunpack.c.l.b16 %v902
    %v974 = vunpack.c.l.b16 %v903
    %v975 = vunpack.c.l.b16 %v904
    %v976 = vunpack.c.l.b16 %v905
    %v977 = vunpack.c.l.b16 %v906
    %v978 = vunpack.c.l.b16 %v907
    %v979 = vunpack.c.l.b16 %v908
    %v980 = vunpack.c.l.b16 %v909
    %v981 = vunpack.c.l.b16 %v910
    %v982 = vunpack.c.l.b16 %v911
    %v983 = vunpack.c.l.b16 %v912
    %v984 = vunpack.c.l.b16 %v913
    %v985 = vpack.c.b16 %v954, %v953
    %v986 = vpack.c.b16 %v956, %v955
    %v987 = vpack.c.b16 %v958, %v957
    %v988 = vpack.c.b16 %v960, %v959
    %v989 = vpack.c.b16 %v962, %v961
    %v990 = vpack.c.b16 %v964, %v963
    %v991 = vpack.c.b16 %v966, %v965
    %v992 = vpack.c.b16 %v968, %v967
    %v993 = vpack.c.b16 %v970, %v969
    %v994 = vpack.c.b16 %v972, %v971
    %v995 = vpack.c.b16 %v974, %v973
    %v996 = vpack.c.b16 %v976, %v975
    %v997 = vpack.c.b16 %v978, %v977
    %v998 = vpack.c.b16 %v980, %v979
    %v999 = vpack.c.b16 %v982, %v981
    %v1000 = vpack.c.b16 %v984, %v983
    %1017 = vmatprep.subr.bf16.mxu0 0
    %1018 = vmatpush1.bf16.msra.mxu0 %v985
    %1019 = vmatprep.subr.bf16.mxu0 0
    %1020 = vmatpush1.bf16.msra.mxu0 %v986
    %1021 = vmatprep.subr.bf16.mxu0 0
    %1022 = vmatpush1.bf16.msra.mxu0 %v987
    %1023 = vmatprep.subr.bf16.mxu0 0
    %1024 = vmatpush1.bf16.msra.mxu0 %v988
    %1025 = vmatprep.subr.bf16.mxu0 0
    %1026 = vmatpush1.bf16.msra.mxu0 %v989
    %1027 = vmatprep.subr.bf16.mxu0 0
    %1028 = vmatpush1.bf16.msra.mxu0 %v990
    %1029 = vmatprep.subr.bf16.mxu0 0
    %1030 = vmatpush1.bf16.msra.mxu0 %v991
    %1031 = vmatprep.subr.bf16.mxu0 0
    %1032 = vmatpush1.bf16.msra.mxu0 %v992
    %1033 = vmatprep.subr.bf16.mxu0 0
    %1034 = vmatpush1.bf16.msra.mxu0 %v993
    %1035 = vmatprep.subr.bf16.mxu0 0
    %1036 = vmatpush1.bf16.msra.mxu0 %v994
    %1037 = vmatprep.subr.bf16.mxu0 0
    %1038 = vmatpush1.bf16.msra.mxu0 %v995
    %1039 = vmatprep.subr.bf16.mxu0 0
    %1040 = vmatpush1.bf16.msra.mxu0 %v996
    %1041 = vmatprep.subr.bf16.mxu0 0
    %1042 = vmatpush1.bf16.msra.mxu0 %v997
    %1043 = vmatprep.subr.bf16.mxu0 0
    %1044 = vmatpush1.bf16.msra.mxu0 %v998
    %1045 = vmatprep.subr.bf16.mxu0 0
    %1046 = vmatpush1.bf16.msra.mxu0 %v999
    %1047 = vmatprep.subr.bf16.mxu0 0
    %1048 = vmatpush1.bf16.msra.mxu0 %v1000
    %1049 = vmatprep.mubr.bf16.mxu0 %v881
    %1050 = vmatmul.mubr.bf16.gmra.mrb[0].mxu0 %v880
    %v1051 = vpop.f32.mrb[0].mxu0
    %v1052 = vadd.f32 %v919, %v1051
    %v1053 = vpop.f32.mrb[0].mxu0
    %v1054 = vpop.f32.mrb[0].mxu0
    %v1055 = vadd.f32 %v919, %v1054
    %v1056 = vpop.f32.mrb[0].mxu0
    %1057 = vdwg.mxu0
    %v1058 = vmax.f32 %v1052, 0.0
    %v1059 = vmax.f32 %v1055, 0.0
    %v1060 = vpack.c.bf16 %v1059, %v1058
    %v1061 = vld [vmem:[%s7] sm:$0xf]
    %v1062 = vld [vmem:[%s7 + $0x4] sm:$0xf]
    %v1063 = vld [vmem:[%s7 + $0x8] sm:$0xf]
    %v1064 = vld [vmem:[%s7 + $0xc] sm:$0xf]
    %v1065 = vld [vmem:[%s7 + $0x10] sm:$0xf]
    %v1066 = vld [vmem:[%s7 + $0x14] sm:$0xf]
    %v1067 = vld [vmem:[%s7 + $0x18] sm:$0xf]
    %v1068 = vld [vmem:[%s7 + $0x1c] sm:$0xf]
    %v1069 = vld [vmem:[%s7 + $0x20] sm:$0xf]
    %v1070 = vld [vmem:[%s7 + $0x24] sm:$0xf]
    %v1071 = vld [vmem:[%s7 + $0x28] sm:$0xf]
    %v1072 = vld [vmem:[%s7 + $0x2c] sm:$0xf]
    %v1073 = vld [vmem:[%s7 + $0x30] sm:$0xf]
    %v1074 = vld [vmem:[%s7 + $0x34] sm:$0xf]
    %v1075 = vld [vmem:[%s7 + $0x38] sm:$0xf]
    %v1076 = vld [vmem:[%s7 + $0x3c] sm:$0xf]
    %v1077 = vld [vmem:[%s8] sm:$0x1]
    %v1079 = vlaneseq
    %v1080 = vshrl.u32 %v1079, 7
    %v1081 = vsub.s32 0, %v1080
    %v1082 = vrot.slane %v1077, %v1081
    %v1100 = vunpack.c.l.b16 %v1061
    %v1101 = vunpack.c.l.b16 %v1062
    %v1102 = vunpack.c.l.b16 %v1063
    %v1103 = vunpack.c.l.b16 %v1064
    %v1104 = vunpack.c.l.b16 %v1065
    %v1105 = vunpack.c.l.b16 %v1066
    %v1106 = vunpack.c.l.b16 %v1067
    %v1107 = vunpack.c.l.b16 %v1068
    %v1108 = vunpack.c.l.b16 %v1069
    %v1109 = vunpack.c.l.b16 %v1070
    %v1110 = vunpack.c.l.b16 %v1071
    %v1111 = vunpack.c.l.b16 %v1072
    %v1112 = vunpack.c.l.b16 %v1073
    %v1113 = vunpack.c.l.b16 %v1074
    %v1114 = vunpack.c.l.b16 %v1075
    %v1115 = vunpack.c.l.b16 %v1076
    %v1116 = vpack.c.b16 %v1101, %v1100
    %v1117 = vpack.c.b16 %v1103, %v1102
    %v1118 = vpack.c.b16 %v1105, %v1104
    %v1119 = vpack.c.b16 %v1107, %v1106
    %v1120 = vpack.c.b16 %v1109, %v1108
    %v1121 = vpack.c.b16 %v1111, %v1110
    %v1122 = vpack.c.b16 %v1113, %v1112
    %v1123 = vpack.c.b16 %v1115, %v1114
    %1132 = vmatprep.subr.bf16.mxu0 0
    %1133 = vmatpush1.bf16.msra.mxu0 %v1116
    %1134 = vmatprep.subr.bf16.mxu0 0
    %1135 = vmatpush1.bf16.msra.mxu0 %v1117
    %1136 = vmatprep.subr.bf16.mxu0 0
    %1137 = vmatpush1.bf16.msra.mxu0 %v1118
    %1138 = vmatprep.subr.bf16.mxu0 0
    %1139 = vmatpush1.bf16.msra.mxu0 %v1119
    %1140 = vmatprep.subr.bf16.mxu0 0
    %1141 = vmatpush1.bf16.msra.mxu0 %v1120
    %1142 = vmatprep.subr.bf16.mxu0 0
    %1143 = vmatpush1.bf16.msra.mxu0 %v1121
    %1144 = vmatprep.subr.bf16.mxu0 0
    %1145 = vmatpush1.bf16.msra.mxu0 %v1122
    %1146 = vmatprep.subr.bf16.mxu0 0
    %1147 = vmatpush1.bf16.msra.mxu0 %v1123
    %1148 = vmatprep.subr.bf16.mxu0 0
    %1149 = vmatpush1.bf16.msra.mxu0 0
    %1150 = vmatprep.subr.bf16.mxu0 0
    %1151 = vmatpush1.bf16.msra.mxu0 0
    %1152 = vmatprep.subr.bf16.mxu0 0
    %1153 = vmatpush1.bf16.msra.mxu0 0
    %1154 = vmatprep.subr.bf16.mxu0 0
    %1155 = vmatpush1.bf16.msra.mxu0 0
    %1156 = vmatprep.subr.bf16.mxu0 0
    %1157 = vmatpush1.bf16.msra.mxu0 0
    %1158 = vmatprep.subr.bf16.mxu0 0
    %1159 = vmatpush1.bf16.msra.mxu0 0
    %1160 = vmatprep.subr.bf16.mxu0 0
    %1161 = vmatpush1.bf16.msra.mxu0 0
    %1162 = vmatprep.subr.bf16.mxu0 0
    %1163 = vmatpush1.bf16.msra.mxu0 0
    %1164 = vmatprep.mubr.bf16.mxu0 0
    %1165 = vmatmul.mubr.bf16.gmra.mrb[0].mxu0 %v1060
    %v1166 = vpop.f32.mrb[0].mxu0
    %v1167 = vadd.f32 %v1082, %v1166
    %v1168 = vpop.f32.mrb[0].mxu0
    %v1169 = vpop.f32.mrb[0].mxu0
    %v1170 = vadd.f32 %v1082, %v1169
    %v1171 = vpop.f32.mrb[0].mxu0
    %1172 = vdwg.mxu0
    %v1173 = vmax.f32 %v1167, 0.0
    %v1174 = vmax.f32 %v1170, 0.0
    %vm1175 = vcmask 64512
    %1176 = vst.msk [vmem:[%s9] sm:$0xff] %vm1175, %v1173
    %1177 = vst.msk [vmem:[%s9 + $0x8] sm:$0xff] %vm1175, %v1174
    // Predicated region
    $region50: #{tpu_custom_call.1} parent=1 // pred_check
      _
    $region51: #{tpu_custom_call.1} parent=1 // pred_check_branch
      %1179 = sbr.rel (0) target = $region53
    $region52: #{tpu_custom_call.1} parent=1 // pred_region
      _
    $region53: #{tpu_custom_call.1} parent=1 // pred_fallthru
      _
    // Predicated region
    $region54: #{tpu_custom_call.1} parent=1 // pred_check
      _
    $region55: #{tpu_custom_call.1} parent=1 // pred_check_branch
      %1181 = sbr.rel (0) target = $region57
    $region56: #{tpu_custom_call.1} parent=1 // pred_region
      _
    $region57: #{tpu_custom_call.1} parent=1 // pred_fallthru
      _
    %1182 = vsyncpa [#allocation3], 1
    %1183 = vsyncpa [#allocation5], 1

</llo_original>
